<compile_context>
chip_gen: v7x
topology: tpu7x:2x2x1
jax: 0.10.0
libtpu: 0.0.40
codegen_flags: <defaults>
</compile_context>

<pallas_src>
import functools

import jax
import jax.numpy as jnp
from jax.experimental import pallas as pl
from jax.experimental.pallas import tpu as pltpu


def _round_up(x: int, m: int) -> int:
    return ((x + m - 1) // m) * m


def _cost_sen_loss_kernel(n_rows, feat_ref, side_ref, out_ref):
    """One row-tile: partial = -sum_i w_i * (1 - p_y)^2 * logp_y.

    n_rows is the true (unpadded) number of rows, closed over as a Python int.
    side_ref[:, 0] = alpha_i / N   (NLL mean already folded in)
    side_ref[:, 1] = x[i, y_i]     (label-column logit, gathered in wrapper)
    """
    i = pl.program_id(0)
    tn = feat_ref.shape[0]

    x = feat_ref[...].astype(jnp.float32)          # (TN, C) cast after load
    side = side_ref[...]                           # (TN, 2) f32

    # Row-validity mask for the ragged last tile.  Mask logits AND side values
    # so garbage OOB rows cannot produce NaN/Inf.
    row_ids = i * tn + jax.lax.broadcasted_iota(jnp.int32, (tn, 1), 0)
    valid = row_ids < n_rows                       # (TN, 1) bool

    x = jnp.where(valid, x, 0.0)                   # (TN, C)
    w = jnp.where(valid, side[:, 0:1], 0.0)        # (TN, 1)
    x_y = jnp.where(valid, side[:, 1:2], 0.0)      # (TN, 1)

    # Numerically stable analytic log-softmax of the label column only.
    m = jnp.max(x, axis=1, keepdims=True)          # (TN, 1)  XLU reduce
    ex = jnp.exp(x - m)                            # (TN, C)  only full-width EUP op
    denom = jnp.sum(ex, axis=1, keepdims=True)     # (TN, 1)  XLU reduce

    logp_y = (x_y - m) - jnp.log(denom)            # (TN, 1)
    p_y = jnp.exp(logp_y)
    beta_y = (1.0 - p_y) ** 2
    partial = -jnp.sum(w * beta_y * logp_y)        # scalar; invalid rows give 0

    # Lane-dense per-tile partial (scalar broadcast over the block); wrapper
    # reads [:, 0, 0] and sums.  Keeps the grid axis fully parallel.
    out_ref[...] = jnp.full(out_ref.shape, partial, dtype=out_ref.dtype)


def cost_sen_loss(feature, label):
    """feature: (N, C) float (any float dtype); label: (N,) int in [0, C).

    Returns the scalar f32 loss matching CostSenLoss.forward.
    """
    N, C = feature.shape
    label_i = label.astype(jnp.int32)

    # --- per-sample class count ni and cost weight alpha (cheap, plain JAX) ---
    counts = jnp.zeros((C,), jnp.float32).at[label_i].add(1.0)   # class histogram
    ni = counts[label_i]                                         # (N,), each >= 1
    r = ni / jnp.float32(N)
    alpha = jnp.exp(r - 1.0) / r
    w = (alpha / jnp.float32(N)).astype(jnp.float32)             # fold NLL mean, (N,)

    # --- hoist the label-column gather out of the kernel (O(N) work) ---
    x_y = jnp.take_along_axis(feature, label_i[:, None], axis=1)[:, 0]
    side = jnp.stack([w, x_y.astype(jnp.float32)], axis=1)       # (N, 2) f32

    # --- per-generation VMEM budget -> row-tile size (no hard row cap) ------
    # Budget is in elements of the (tn, C) slab; total VMEM use is roughly
    #   2 * tn*C*itemsize (double-buffered input) + ~3 * tn*C*4 (f32 temps),
    # which stays well inside the scoped limit for both budgets below.
    try:
        vmem_bytes = pltpu.get_tpu_info().vmem_capacity_bytes
    except Exception:
        vmem_bytes = 64 * 1024 * 1024                            # conservative
    if vmem_bytes >= 100 * 1024 * 1024:          # v5e / v6e (128 MiB physical)
        elems_budget = 2 * 1024 * 1024           # ~8 MiB f32 per slab
        vmem_limit = 64 * 1024 * 1024
    else:                                        # v7x (64 MiB physical)
        elems_budget = 1 * 1024 * 1024           # ~4 MiB f32 per slab
        vmem_limit = 32 * 1024 * 1024

    rows_budget = max(8, elems_budget // max(1, C))
    tn = min(rows_budget, _round_up(N, 8))
    tn = max(8, (tn // 8) * 8)                   # multiple of 8 sublanes
    num_tiles = pl.cdiv(N, tn)                   # Python int (static shapes)

    kernel = functools.partial(_cost_sen_loss_kernel, N)

    partials = pl.pallas_call(
        kernel,
        out_shape=jax.ShapeDtypeStruct((num_tiles, 8, 128), jnp.float32),
        grid=(num_tiles,),
        in_specs=[
            pl.BlockSpec((tn, C), lambda i: (i, 0)),   # feature, native dtype
            pl.BlockSpec((tn, 2), lambda i: (i, 0)),   # merged (w, x_y) side input
        ],
        out_specs=pl.BlockSpec((1, 8, 128), lambda i: (i, 0, 0)),
        compiler_params=pltpu.CompilerParams(
            dimension_semantics=("parallel",),         # tiles independent -> v7x 2 TC
            vmem_limit_bytes=vmem_limit,
        ),
    )(feature, side)

    return jnp.sum(partials[:, 0, 0])


def cost_sen_loss_ref(feature, label):
    """Pure-JAX reference mirroring the PyTorch forward."""
    feature = feature.astype(jnp.float32)
    N = feature.shape[0]
    p = jax.nn.softmax(feature, axis=1)
    logp = jnp.log(p)
    beta = (1.0 - p) ** 2
    ni = jnp.sum(label[:, None] == label[None, :], axis=1).astype(jnp.float32)
    r = ni / N
    alpha = (jnp.exp(r - 1.0) / r)[:, None]
    cs = alpha * beta * logp
    picked = jnp.take_along_axis(cs, label[:, None].astype(jnp.int32), axis=1)[:, 0]
    return -jnp.mean(picked)


if __name__ == "__main__":
    key = jax.random.PRNGKey(0)
    k_feat, k_lab, k_feat2, k_lab2 = jax.random.split(key, 4)

    # Small shapes consistent with the module: (batch N, classes C).
    N, C = 8, 32
    feature = jax.random.normal(k_feat, (N, C), dtype=jnp.float32)
    label = jax.random.randint(k_lab, (N,), 0, 4, dtype=jnp.int32)

    loss = cost_sen_loss(feature, label)
    jax.block_until_ready(loss)
    ref = cost_sen_loss_ref(feature, label)
    assert jnp.allclose(loss, ref, rtol=1e-5, atol=1e-5), (loss, ref)

    # Ragged case (N not a multiple of the 8-row tile) exercises the in-kernel
    # boundary masking that replaced the wrapper-side pad copy.
    N2 = 13
    feature2 = jax.random.normal(k_feat2, (N2, C), dtype=jnp.float32)
    label2 = jax.random.randint(k_lab2, (N2,), 0, 6, dtype=jnp.int32)
    loss2 = cost_sen_loss(feature2, label2)
    jax.block_until_ready(loss2)
    ref2 = cost_sen_loss_ref(feature2, label2)
    assert jnp.allclose(loss2, ref2, rtol=1e-5, atol=1e-5), (loss2, ref2)

    print("KERNEL_OK")
</pallas_src>

<mosaic_0001>
module attributes {stable_mosaic.version = 11 : i64} {
  func.func @_cost_sen_loss_kernel(%arg0: i32, %arg1: memref<8x32xf32, #tpu.memory_space<vmem>>, %arg2: memref<8x2xf32, #tpu.memory_space<vmem>>, %arg3: memref<1x8x128xf32, #tpu.memory_space<vmem>>) attributes {dimension_semantics = [#tpu.dimension_semantics<parallel>], iteration_bounds = array<i64: 1>, scalar_prefetch = 0 : i64, scratch_operands = 0 : i64, tpu.core_type = #tpu.core_type<tc>, window_params = [{transform_indices = @transform_0, window_bounds = array<i64: 8, 32>}, {transform_indices = @transform_1, window_bounds = array<i64: 8, 2>}, {transform_indices = @transform_2, window_bounds = array<i64: 1, 8, 128>}]} {
    %c0 = arith.constant 0 : index
    %c0_0 = arith.constant 0 : index
    %0 = vector.load %arg1[%c0, %c0_0] : memref<8x32xf32, #tpu.memory_space<vmem>>, vector<8x32xf32>
    %c0_1 = arith.constant 0 : index
    %c0_2 = arith.constant 0 : index
    %1 = vector.load %arg2[%c0_1, %c0_2] : memref<8x2xf32, #tpu.memory_space<vmem>>, vector<8x2xf32>
    %c8_i32 = arith.constant 8 : i32
    %2 = arith.muli %arg0, %c8_i32 : i32
    %3 = tpu.iota {dimensions = array<i32: 0>} : vector<8x1xi32>
    %4 = vector.broadcast %2 : i32 to vector<8x1xi32>
    %5 = arith.addi %4, %3 : vector<8x1xi32>
    %c8_i32_3 = arith.constant 8 : i32
    %6 = vector.broadcast %c8_i32_3 : i32 to vector<8x1xi32>
    %7 = arith.cmpi slt, %5, %6 : vector<8x1xi32>
    %cst = arith.constant 0.000000e+00 : f32
    %8 = vector.shape_cast %7 : vector<8x1xi1> to vector<8x1xi1>
    %9 = vector.broadcast %8 : vector<8x1xi1> to vector<8x32xi1>
    %10 = vector.broadcast %cst : f32 to vector<8x32xf32>
    %11 = arith.select %9, %0, %10 : vector<8x32xi1>, vector<8x32xf32>
    %12 = vector.extract_strided_slice %1 {offsets = [0, 0], sizes = [8, 1], strides = [1, 1]} : vector<8x2xf32> to vector<8x1xf32>
    %cst_4 = arith.constant 0.000000e+00 : f32
    %13 = vector.broadcast %cst_4 : f32 to vector<8x1xf32>
    %14 = arith.select %7, %12, %13 : vector<8x1xi1>, vector<8x1xf32>
    %15 = vector.extract_strided_slice %1 {offsets = [0, 1], sizes = [8, 1], strides = [1, 1]} : vector<8x2xf32> to vector<8x1xf32>
    %cst_5 = arith.constant 0.000000e+00 : f32
    %16 = vector.broadcast %cst_5 : f32 to vector<8x1xf32>
    %17 = arith.select %7, %15, %16 : vector<8x1xi1>, vector<8x1xf32>
    %cst_6 = arith.constant dense<0xFF800000> : vector<8xf32>
    %18 = vector.multi_reduction <maximumf>, %11, %cst_6 [1] : vector<8x32xf32> to vector<8xf32>
    %19 = vector.shape_cast %18 : vector<8xf32> to vector<8x1xf32>
    %20 = vector.broadcast %19 : vector<8x1xf32> to vector<8x32xf32>
    %21 = arith.subf %11, %20 : vector<8x32xf32>
    %22 = math.exp %21 : vector<8x32xf32>
    %cst_7 = arith.constant dense<0.000000e+00> : vector<8xf32>
    %23 = vector.multi_reduction <add>, %22, %cst_7 [1] : vector<8x32xf32> to vector<8xf32>
    %24 = vector.shape_cast %23 : vector<8xf32> to vector<8x1xf32>
    %25 = arith.subf %17, %19 : vector<8x1xf32>
    %26 = math.log %24 : vector<8x1xf32>
    %27 = arith.subf %25, %26 : vector<8x1xf32>
    %28 = math.exp %27 : vector<8x1xf32>
    %cst_8 = arith.constant 1.000000e+00 : f32
    %29 = vector.broadcast %cst_8 : f32 to vector<8x1xf32>
    %30 = arith.subf %29, %28 : vector<8x1xf32>
    %31 = arith.mulf %30, %30 : vector<8x1xf32>
    %32 = arith.mulf %14, %31 : vector<8x1xf32>
    %33 = arith.mulf %32, %27 : vector<8x1xf32>
    %34 = vector.shape_cast %33 : vector<8x1xf32> to vector<1x8x1xf32>
    %cst_9 = arith.constant dense<0.000000e+00> : vector<1xf32>
    %35 = vector.multi_reduction <add>, %34, %cst_9 [1, 2] : vector<1x8x1xf32> to vector<1xf32>
    %36 = vector.shape_cast %35 : vector<1xf32> to vector<1x1x1xf32>
    %37 = vector.extract %36[0, 0, 0] : f32 from vector<1x1x1xf32>
    %cst_10 = arith.constant 0.000000e+00 : f32
    %38 = arith.subf %cst_10, %37 : f32
    %39 = vector.broadcast %38 : f32 to vector<1x8x128xf32>
    %c0_11 = arith.constant 0 : index
    %c0_12 = arith.constant 0 : index
    %c0_13 = arith.constant 0 : index
    %40 = vector.load %arg3[%c0_11, %c0_12, %c0_13] : memref<1x8x128xf32, #tpu.memory_space<vmem>>, vector<1x8x128xf32>
    tpu.vector_store %arg3[%c0_11, %c0_12, %c0_13], %39 {strides = array<i32>} : memref<1x8x128xf32, #tpu.memory_space<vmem>>, vector<1x8x128xf32>,
    return
  }
  func.func @transform_0(%arg0: i32) -> (i32, i32) {
    %c0_i32 = arith.constant 0 : i32
    %c0_i32_0 = arith.constant 0 : i32
    return %arg0, %c0_i32 : i32, i32
  }
  func.func @transform_1(%arg0: i32) -> (i32, i32) {
    %c0_i32 = arith.constant 0 : i32
    %c0_i32_0 = arith.constant 0 : i32
    return %arg0, %c0_i32 : i32, i32
  }
  func.func @transform_2(%arg0: i32) -> (i32, i32, i32) {
    %c0_i32 = arith.constant 0 : i32
    %c0_i32_0 = arith.constant 0 : i32
    %c0_i32_1 = arith.constant 0 : i32
    return %arg0, %c0_i32, %c0_i32_0 : i32, i32, i32
  }
}

</mosaic_0001>

<llo_original>
// kernel: tpu_custom_call.1
$region0: #{tpu_custom_call.1}
  #allocation0 [shape = 'u32[]', space=smem, size = 0x4, offset = 0x4, fixed_abs, tag = 'smem constant byte address 0x4 - core index']
  #allocation1 [shape = 'u32[144,128]{1,0:T(1,128)}', space=vmem, size = 0x12000, scoped, tag = 'internal scratch']
  %s0 = inlined_call_operand.vmem [shape: f32[8,32], index: 0, kind: input, shape index: {}]
  %s1 = inlined_call_operand.vmem [shape: f32[8,2], index: 1, kind: input, shape index: {}]
  %s2 = inlined_call_operand.hbm [shape: f32[1,8,128], index: 2, kind: output, shape index: {}]
  %s3 = sld [smem:[#allocation0]]
  $region18: #{tpu_custom_call.1} parent=0
    _
  %s5 = ssub.s32 1, %s3
  %s6 = scalar_select 0, %s5, %s3
  $region1: #{tpu_custom_call.1} parent=0
    #allocation2 [shape = 'u8[4096]{0}', space=vmem, size = 0x1000, scoped, tag = 'output window, operand 0, single buffered']
    #allocation3 [shape = 's32[1]{0}', space=sflag, size = 0x4, scoped, tag = 'scoped memory for tpu_custom_call.1']
    %7 = vsyncpa [#allocation3], 0
    // Predicated region
    $region2: #{tpu_custom_call.1} parent=1 // pred_check
      _
    $region3: #{tpu_custom_call.1} parent=1 // pred_check_branch
      %9 = sbr.rel (0) target = $region5
    $region4: #{tpu_custom_call.1} parent=1 // pred_region
      _
    $region5: #{tpu_custom_call.1} parent=1 // pred_fallthru
      _
    // Predicated region
    $region6: #{tpu_custom_call.1} parent=1 // pred_check
      _
    $region7: #{tpu_custom_call.1} parent=1 // pred_check_branch
      %11 = sbr.rel (0) target = $region9
    $region8: #{tpu_custom_call.1} parent=1 // pred_region
      _
    $region9: #{tpu_custom_call.1} parent=1 // pred_fallthru
      _
    %v12 = vld [vmem:[%s0] sm:$0xff]
    %v13 = vld [vmem:[%s1] sm:$0xff]
    %s14 = smul.u32 0, 8
    %v15 = vlaneseq
    %v16 = vshrl.u32 %v15, 7
    %v17 = vstv %s14
    %v18 = vadd.s32 %v17, %v16
    %vm19 = vcmp.lt.s32.totalorder %v18, 8
    %v20 = vsel %vm19, 1, 0
    %vm21 = vcmp.eq.s32.totalorder %v20, 1
    %v22 = vsel %vm21, %v12, 0.0
    %v23 = vsel %vm19, %v13, 0.0
    %vm24 = vcmask 261120
    %v25 = vsel %vm24, %v22, -inf
    %26 = vmax.xlane.f32.xlu0 %v25
    %v27 = vpop.xlane.xlu0 %26
    %v28 = vsub.f32 %v22, %v27
    %v29 = vmul.f32 %v28, 1.442695
    %v30 = vpow.pop %v29
    %v31 = vsel %vm24, %v30, 0.0
    %32 = vadd.xlane.f32.xlu0 %v31
    %v33 = vpop.xlane.xlu0 %32
    %v34 = vsub.f32 %v23, %v27
    %v35 = vlog2.pop %v33
    %v36 = vmul.f32 %v35, 0.6931472
    %v37 = vsub.f32 %v34, %v36
    %v38 = vmul.f32 %v37, 1.442695
    %v39 = vpow.pop %v38
    %v40 = vsub.f32 1.0, %v39
    %v41 = vmul.f32 %v40, %v40
    %43 = vrot.lane.b32.xlu0 %v41, 127
    %v44 = vpop.permute.xlu0 %43
    %v46 = vmul.f32 %v23, %v44
    %48 = vrot.lane.b32.xlu0 %v37, 127
    %v49 = vpop.permute.xlu0 %48
    %v51 = vmul.f32 %v46, %v49
    %vm52 = vcmask 7168
    %v53 = vsel %vm52, %v51, 0.0
    %54 = vadd.xlane.f32.xlu0 %v53
    %v55 = vpop.xlane.xlu0 %54
    %v56 = vrot.slane %v55, 4
    %v57 = vadd.f32 %v55, %v56
    %v58 = vrot.slane %v57, 2
    %v59 = vadd.f32 %v57, %v58
    %v60 = vrot.slane %v59, 1
    %v61 = vadd.f32 %v59, %v60
    %s62 = vtos %v61
    %s63 = ssub.f32 0.0, %s62
    %v64 = vstv %s63
    %65 = vst [vmem:[#allocation2] sm:$0xff] %v64
    // Predicated region
    $region10: #{tpu_custom_call.1} parent=1 // pred_check
      _
    $region11: #{tpu_custom_call.1} parent=1 // pred_check_branch
      %67 = sbr.rel (0) target = $region13
    $region12: #{tpu_custom_call.1} parent=1 // pred_region
      %s69 = ssub.s32 128, 128
      %70 = vsyncadd [#allocation3], %s69
      %s72 = sshll.u32 [#allocation2], 4
      %s73 = int_to_ptr.vmem [resolvable:$true] %s72
      %75 = dma.vmem_to_hbm [thread:$0]  %s73, 128, %s2, [#allocation3]
    $region13: #{tpu_custom_call.1} parent=1 // pred_fallthru
      _
    // Predicated region
    $region14: #{tpu_custom_call.1} parent=1 // pred_check
      _
    $region15: #{tpu_custom_call.1} parent=1 // pred_check_branch
      %77 = sbr.rel (0) target = $region17
    $region16: #{tpu_custom_call.1} parent=1 // pred_region
      %78 = dma.done [#allocation3], 128
    $region17: #{tpu_custom_call.1} parent=1 // pred_fallthru
      _
    %79 = vsyncpa [#allocation3], 1

</llo_original>
